<compile_context>
chip_gen: v6e
topology: v6e:2x2x1
jax: 0.10.0
libtpu: 0.0.40
codegen_flags: <defaults>
</compile_context>

<pallas_src>
import jax
import jax.numpy as jnp
from jax.experimental import pallas as pl
from jax.experimental.pallas import tpu as pltpu


def _cast_kernel(x_ref, o_ref):
    # float64 -> bool -> uint8  ==  uint8(x != 0); NaN != 0 is True (-> 1),
    # matching torch's double->bool->uint8 chain.
    o_ref[...] = (x_ref[...] != 0).astype(jnp.uint8)


def _round_up(n, m):
    return -(-n // m) * m


_LANE_CANDIDATES = (4096, 2048, 1024, 512, 256, 128)


def fcast_test(x, *, use_pallas=None):
    """x: float32 array (any shape). Returns uint8 array of the same shape."""
    orig_shape = x.shape
    total = x.size

    if total == 0:
        return jnp.zeros(orig_shape, jnp.uint8)

    if use_pallas is None:
        # Pallas launch overhead dominates below ~1M elements; let XLA fuse it.
        use_pallas = total >= (1 << 20)
    if not use_pallas:
        return (x != 0).astype(jnp.uint8)

    # ---- lane width: largest multiple of 128 dividing `total`, so the common
    # case is a pure reshape (no wrapper-side HBM copies at all).
    lanes = None
    for cand in _LANE_CANDIDATES:
        if total % cand == 0:
            lanes = cand
            break

    xf = x.reshape(-1)
    if lanes is None:
        # Padding unavoidable: pad only up to the next 128-multiple (the pad /
        # slice-back copies are then as small as possible).
        lanes = 128
        padded_total = _round_up(total, lanes)
        xf = jnp.pad(xf, (0, padded_total - total))
    else:
        padded_total = total

    rows = padded_total // lanes
    x2d = xf.reshape(rows, lanes)

    # ---- row tiling.
    if rows <= 64:
        tile_r = rows  # single block spanning the full row extent
    else:
        tile_r = max(32, (8 << 20) // (4 * lanes))       # ~8 MiB f32 per tile
        # Aim for >= 8 grid steps (keeps the pipeline busy; lets v7x shard the
        # "parallel" axis across both TCs) without dropping below ~1 MiB tiles.
        min_tile_r = max(32, (1 << 20) // (4 * lanes))
        eight_step = _round_up(pl.cdiv(rows, 8), 32)
        tile_r = min(tile_r, max(eight_step, min_tile_r))
        # Always guarantee at least 2 steps so the second TC is never idle.
        if pl.cdiv(rows, tile_r) == 1:
            tile_r = _round_up(pl.cdiv(rows, 2), 32)

    grid = (pl.cdiv(rows, tile_r),)

    out2d = pl.pallas_call(
        _cast_kernel,
        out_shape=jax.ShapeDtypeStruct((rows, lanes), jnp.uint8),
        grid_spec=pltpu.PrefetchScalarGridSpec(
            num_scalar_prefetch=0,
            grid=grid,
            in_specs=[pl.BlockSpec((tile_r, lanes), lambda i: (i, 0))],
            out_specs=pl.BlockSpec((tile_r, lanes), lambda i: (i, 0)),
        ),
        compiler_params=pltpu.CompilerParams(
            dimension_semantics=("parallel",),   # v7x: shard tiles over 2 TCs
            vmem_limit_bytes=32 << 20,           # safe on v5e/v6e/v7x
        ),
        cost_estimate=pl.CostEstimate(
            flops=padded_total,
            transcendentals=0,
            bytes_accessed=5 * padded_total,     # 4 B in + 1 B out per elem
        ),
    )(x2d)

    out_flat = out2d.reshape(-1)
    if padded_total != total:
        out_flat = out_flat[:total]
    return out_flat.reshape(orig_shape)


if __name__ == "__main__":
    key = jax.random.PRNGKey(0)

    # Small NCHW input consistent with a conv-style module test.
    x = jax.random.normal(key, (2, 4, 16, 16), dtype=jnp.float32)
    # Inject exact zeros so the bool cast is exercised on both branches.
    x = x.at[0, 0, 0, :8].set(0.0)

    out = fcast_test(x, use_pallas=True)  # force the Pallas path for the test
    out = jax.block_until_ready(out)

    ref = (x != 0).astype(jnp.uint8)
    assert out.dtype == jnp.uint8
    assert out.shape == x.shape
    assert bool(jnp.all(out == ref))

    # Shape whose element count is NOT a multiple of 128: exercises the
    # (now minimal) pad / slice-back path.
    key2 = jax.random.PRNGKey(1)
    y = jax.random.normal(key2, (2, 3, 17, 19), dtype=jnp.float32)
    y = y.at[1, 2, 5, :4].set(0.0)
    out_y = jax.block_until_ready(fcast_test(y, use_pallas=True))
    ref_y = (y != 0).astype(jnp.uint8)
    assert out_y.dtype == jnp.uint8
    assert out_y.shape == y.shape
    assert bool(jnp.all(out_y == ref_y))

    # Shape large enough to take the multi-step tiled path (>= 2 grid steps,
    # zero wrapper copies: 524288 elements -> lanes=4096, rows=128).
    key3 = jax.random.PRNGKey(2)
    z = jax.random.normal(key3, (4, 8, 128, 128), dtype=jnp.float32)
    z = z.at[0, 0, :2, :].set(0.0)
    out_z = jax.block_until_ready(fcast_test(z, use_pallas=True))
    ref_z = (z != 0).astype(jnp.uint8)
    assert out_z.dtype == jnp.uint8
    assert out_z.shape == z.shape
    assert bool(jnp.all(out_z == ref_z))

    print("KERNEL_OK")
</pallas_src>

<mosaic_0001>
module attributes {stable_mosaic.version = 11 : i64} {
  func.func @_cast_kernel(%arg0: i32, %arg1: memref<1x2048xf32, #tpu.memory_space<vmem>>, %arg2: memref<1x2048xi8, #tpu.memory_space<vmem>>) attributes {dimension_semantics = [#tpu.dimension_semantics<parallel>], iteration_bounds = array<i64: 1>, scalar_prefetch = 0 : i64, scratch_operands = 0 : i64, tpu.core_type = #tpu.core_type<tc>, window_params = [{transform_indices = @transform_0, window_bounds = array<i64: 1, 2048>}, {transform_indices = @transform_1, window_bounds = array<i64: 1, 2048>}]} {
    %c0 = arith.constant 0 : index
    %c0_0 = arith.constant 0 : index
    %0 = vector.load %arg1[%c0, %c0_0] : memref<1x2048xf32, #tpu.memory_space<vmem>>, vector<1x2048xf32>
    %cst = arith.constant 0.000000e+00 : f32
    %1 = vector.broadcast %cst : f32 to vector<1x2048xf32>
    %2 = arith.cmpf one, %0, %1 : vector<1x2048xf32>
    %3 = arith.extui %2 : vector<1x2048xi1> to vector<1x2048xi8>
    %c0_1 = arith.constant 0 : index
    %c0_2 = arith.constant 0 : index
    %4 = vector.load %arg2[%c0_1, %c0_2] : memref<1x2048xi8, #tpu.memory_space<vmem>>, vector<1x2048xi8>
    tpu.vector_store %arg2[%c0_1, %c0_2], %3 {strides = array<i32>} : memref<1x2048xi8, #tpu.memory_space<vmem>>, vector<1x2048xi8>,
    return
  }
  func.func @transform_0(%arg0: i32) -> (i32, i32) {
    %c0_i32 = arith.constant 0 : i32
    %c0_i32_0 = arith.constant 0 : i32
    return %arg0, %c0_i32 : i32, i32
  }
  func.func @transform_1(%arg0: i32) -> (i32, i32) {
    %c0_i32 = arith.constant 0 : i32
    %c0_i32_0 = arith.constant 0 : i32
    return %arg0, %c0_i32 : i32, i32
  }
}

</mosaic_0001>

<llo_original>
// kernel: tpu_custom_call.1
$region0: #{tpu_custom_call.1}
  #allocation0 [shape = 'u32[]', space=smem, size = 0x4, offset = 0x4, fixed_abs, tag = 'smem constant byte address 0x4 - core index']
  #allocation1 [shape = 'u32[144,128]{1,0:T(1,128)}', space=vmem, size = 0x12000, scoped, tag = 'internal scratch']
  %s0 = inlined_call_operand.hbm [shape: f32[1,2048], index: 0, kind: input, shape index: {}]
  %s1 = inlined_call_operand.hbm [shape: u8[1,2048], index: 1, kind: output, shape index: {}]
  %s2 = sld [smem:[#allocation0]]
  $region18: #{tpu_custom_call.1} parent=0
    _
  %s4 = ssub.s32 1, %s2
  %s5 = scalar_select 0, %s4, %s2
  $region1: #{tpu_custom_call.1} parent=0
    #allocation2 [shape = 'u8[8192]{0}', space=vmem, size = 0x2000, scoped, tag = 'input window, operand 0, single buffered']
    #allocation3 [shape = 's32[1]{0}', space=sflag, size = 0x4, scoped, tag = 'scoped memory for tpu_custom_call.1']
    #allocation4 [shape = 's32[1]{0}', space=sflag, size = 0x4, scoped, tag = 'scoped memory for tpu_custom_call.1']
    #allocation5 [shape = 'u8[8192]{0}', space=vmem, size = 0x2000, scoped, tag = 'output window, operand 0, single buffered']
    %6 = vsyncpa [#allocation3], 0
    %7 = vsyncpa [#allocation4], 0
    // Predicated region
    $region2: #{tpu_custom_call.1} parent=1 // pred_check
      _
    $region3: #{tpu_custom_call.1} parent=1 // pred_check_branch
      %9 = sbr.rel (0) target = $region5
    $region4: #{tpu_custom_call.1} parent=1 // pred_region
      %s11 = ssub.s32 256, 256
      %12 = vsyncadd [#allocation3], %s11
      %s14 = sshll.u32 [#allocation2], 4
      %s15 = int_to_ptr.vmem [resolvable:$true] %s14
      %17 = dma.hbm_to_vmem [thread:$0]  %s0, 256, %s15, [#allocation3]
    $region5: #{tpu_custom_call.1} parent=1 // pred_fallthru
      _
    // Predicated region
    $region6: #{tpu_custom_call.1} parent=1 // pred_check
      _
    $region7: #{tpu_custom_call.1} parent=1 // pred_check_branch
      %19 = sbr.rel (0) target = $region9
    $region8: #{tpu_custom_call.1} parent=1 // pred_region
      %20 = dma.done [#allocation3], 256
    $region9: #{tpu_custom_call.1} parent=1 // pred_fallthru
      _
    %v23 = vld [vmem:[#allocation2] sm:$0xff]
    %v24 = vld [vmem:[#allocation2 + $0x8] sm:$0xff]
    %vm25 = vcmp.ne.f32.partialorder %v23, 0.0
    %vm26 = vcmp.ne.f32.partialorder %v24, 0.0
    %v27 = vsel %vm25, 1, 0
    %v28 = vsel %vm26, 1, 0
    %v30 = vunpack.c.l.s4 286326784
    %v31 = vunpack.c.0.s8 %v30
    %v32 = vlaneseq
    %v33 = vshrl.u32 %v32, 7
    %v34 = vsub.s32 %v31, %v33
    %v35 = vrot.slane %v27, %v34
    %v37 = vunpack.c.l.s4 858989090
    %v38 = vunpack.c.0.s8 %v37
    %v39 = vlaneseq
    %v40 = vshrl.u32 %v39, 7
    %v41 = vsub.s32 %v38, %v40
    %v42 = vrot.slane %v27, %v41
    %v44 = vunpack.c.l.s4 1431651396
    %v45 = vunpack.c.0.s8 %v44
    %v46 = vlaneseq
    %v47 = vshrl.u32 %v46, 7
    %v48 = vsub.s32 %v45, %v47
    %v49 = vrot.slane %v27, %v48
    %v51 = vunpack.c.l.s4 2004313702
    %v52 = vunpack.c.0.s8 %v51
    %v53 = vlaneseq
    %v54 = vshrl.u32 %v53, 7
    %v55 = vsub.s32 %v52, %v54
    %v56 = vrot.slane %v27, %v55
    %v58 = vunpack.c.l.s4 286326784
    %v59 = vunpack.c.0.s8 %v58
    %v60 = vlaneseq
    %v61 = vshrl.u32 %v60, 7
    %v62 = vsub.s32 %v59, %v61
    %v63 = vrot.slane %v28, %v62
    %v65 = vunpack.c.l.s4 858989090
    %v66 = vunpack.c.0.s8 %v65
    %v67 = vlaneseq
    %v68 = vshrl.u32 %v67, 7
    %v69 = vsub.s32 %v66, %v68
    %v70 = vrot.slane %v28, %v69
    %v72 = vunpack.c.l.s4 1431651396
    %v73 = vunpack.c.0.s8 %v72
    %v74 = vlaneseq
    %v75 = vshrl.u32 %v74, 7
    %v76 = vsub.s32 %v73, %v75
    %v77 = vrot.slane %v28, %v76
    %v79 = vunpack.c.l.s4 2004313702
    %v80 = vunpack.c.0.s8 %v79
    %v81 = vlaneseq
    %v82 = vshrl.u32 %v81, 7
    %v83 = vsub.s32 %v80, %v82
    %v84 = vrot.slane %v28, %v83
    %vm85 = vcmp.ne.s32.totalorder %v35, 0
    %vm86 = vcmp.ne.s32.totalorder %v42, 0
    %vm87 = vcmp.ne.s32.totalorder %v49, 0
    %vm88 = vcmp.ne.s32.totalorder %v56, 0
    %vm89 = vcmp.ne.s32.totalorder %v63, 0
    %vm90 = vcmp.ne.s32.totalorder %v70, 0
    %vm91 = vcmp.ne.s32.totalorder %v77, 0
    %vm92 = vcmp.ne.s32.totalorder %v84, 0
    %v93 = vsel %vm85, 1, 0
    %v94 = vsel %vm86, 1, 0
    %v95 = vsel %vm87, 1, 0
    %v96 = vsel %vm88, 1, 0
    %v97 = vsel %vm89, 1, 0
    %v98 = vsel %vm90, 1, 0
    %v99 = vsel %vm91, 1, 0
    %v100 = vsel %vm92, 1, 0
    %v101 = vpack.c.b16 %v94, %v93
    %v102 = vpack.c.b16 %v96, %v95
    %v103 = vpack.c.b8 %v102, %v101
    %v104 = vpack.c.b16 %v98, %v97
    %v105 = vpack.c.b16 %v100, %v99
    %v106 = vpack.c.b8 %v105, %v104
    %vm107 = vnez %v103
    %vm108 = vnez %v106
    %v109 = vsel %vm107, 16843009, 0
    %v110 = vsel %vm108, 16843009, 0
    %v111 = vcombine.high %v109, %v109
    %v113 = vunpack.c.l.s4 1966171168
    %v114 = vunpack.c.0.s8 %v113
    %v115 = vlaneseq
    %v116 = vshrl.u32 %v115, 7
    %v117 = vsub.s32 %v114, %v116
    %v118 = vrot.slane %v109, %v117
    %v120 = vunpack.c.l.s4 1966171168
    %v121 = vunpack.c.0.s8 %v120
    %v122 = vlaneseq
    %v123 = vshrl.u32 %v122, 7
    %v124 = vsub.s32 %v121, %v123
    %v125 = vrot.slane %v111, %v124
    %v126 = vcombine.high %v118, %v118
    %v127 = vcombine.high %v125, %v125
    %v129 = vunpack.c.l.s4 1966171168
    %v130 = vunpack.c.0.s8 %v129
    %v131 = vlaneseq
    %v132 = vshrl.u32 %v131, 7
    %v133 = vsub.s32 %v130, %v132
    %v134 = vrot.slane %v118, %v133
    %v136 = vunpack.c.l.s4 1966171168
    %v137 = vunpack.c.0.s8 %v136
    %v138 = vlaneseq
    %v139 = vshrl.u32 %v138, 7
    %v140 = vsub.s32 %v137, %v139
    %v141 = vrot.slane %v125, %v140
    %v143 = vunpack.c.l.s4 1966171168
    %v144 = vunpack.c.0.s8 %v143
    %v145 = vlaneseq
    %v146 = vshrl.u32 %v145, 7
    %v147 = vsub.s32 %v144, %v146
    %v148 = vrot.slane %v126, %v147
    %v150 = vunpack.c.l.s4 1966171168
    %v151 = vunpack.c.0.s8 %v150
    %v152 = vlaneseq
    %v153 = vshrl.u32 %v152, 7
    %v154 = vsub.s32 %v151, %v153
    %v155 = vrot.slane %v127, %v154
    %v156 = vcombine.high %v134, %v134
    %v157 = vcombine.high %v141, %v141
    %v158 = vcombine.high %v148, %v148
    %v159 = vcombine.high %v155, %v155
    %v160 = vcombine.high %v110, %v110
    %v162 = vunpack.c.l.s4 1966171168
    %v163 = vunpack.c.0.s8 %v162
    %v164 = vlaneseq
    %v165 = vshrl.u32 %v164, 7
    %v166 = vsub.s32 %v163, %v165
    %v167 = vrot.slane %v110, %v166
    %v169 = vunpack.c.l.s4 1966171168
    %v170 = vunpack.c.0.s8 %v169
    %v171 = vlaneseq
    %v172 = vshrl.u32 %v171, 7
    %v173 = vsub.s32 %v170, %v172
    %v174 = vrot.slane %v160, %v173
    %v175 = vcombine.high %v167, %v167
    %v176 = vcombine.high %v174, %v174
    %v178 = vunpack.c.l.s4 1966171168
    %v179 = vunpack.c.0.s8 %v178
    %v180 = vlaneseq
    %v181 = vshrl.u32 %v180, 7
    %v182 = vsub.s32 %v179, %v181
    %v183 = vrot.slane %v167, %v182
    %v185 = vunpack.c.l.s4 1966171168
    %v186 = vunpack.c.0.s8 %v185
    %v187 = vlaneseq
    %v188 = vshrl.u32 %v187, 7
    %v189 = vsub.s32 %v186, %v188
    %v190 = vrot.slane %v174, %v189
    %v192 = vunpack.c.l.s4 1966171168
    %v193 = vunpack.c.0.s8 %v192
    %v194 = vlaneseq
    %v195 = vshrl.u32 %v194, 7
    %v196 = vsub.s32 %v193, %v195
    %v197 = vrot.slane %v175, %v196
    %v199 = vunpack.c.l.s4 1966171168
    %v200 = vunpack.c.0.s8 %v199
    %v201 = vlaneseq
    %v202 = vshrl.u32 %v201, 7
    %v203 = vsub.s32 %v200, %v202
    %v204 = vrot.slane %v176, %v203
    %v205 = vcombine.high %v183, %v183
    %v206 = vcombine.high %v190, %v190
    %v207 = vcombine.high %v197, %v197
    %v208 = vcombine.high %v204, %v204
    %vm209 = vnez %v134
    %vm210 = vnez %v148
    %vm211 = vnez %v156
    %vm212 = vnez %v158
    %vm213 = vnez %v141
    %vm214 = vnez %v155
    %vm215 = vnez %v157
    %vm216 = vnez %v159
    %vm217 = vnez %v183
    %vm218 = vnez %v197
    %vm219 = vnez %v205
    %vm220 = vnez %v207
    %vm221 = vnez %v190
    %vm222 = vnez %v204
    %vm223 = vnez %v206
    %vm224 = vnez %v208
    %v225 = vsel %vm209, 16843009, 0
    %v226 = vsel %vm210, 16843009, 0
    %v227 = vsel %vm211, 16843009, 0
    %v228 = vsel %vm212, 16843009, 0
    %v229 = vsel %vm213, 16843009, 0
    %v230 = vsel %vm214, 16843009, 0
    %v231 = vsel %vm215, 16843009, 0
    %v232 = vsel %vm216, 16843009, 0
    %v233 = vsel %vm217, 16843009, 0
    %v234 = vsel %vm218, 16843009, 0
    %v235 = vsel %vm219, 16843009, 0
    %v236 = vsel %vm220, 16843009, 0
    %v237 = vsel %vm221, 16843009, 0
    %v238 = vsel %vm222, 16843009, 0
    %v239 = vsel %vm223, 16843009, 0
    %v240 = vsel %vm224, 16843009, 0
    %v241 = vcombine.low %v225, %v226
    %v242 = vcombine.low %v227, %v228
    %v243 = vcombine.low %v229, %v230
    %v244 = vcombine.low %v231, %v232
    %v246 = vunpack.c.l.s4 1966171168
    %v247 = vunpack.c.0.s8 %v246
    %v248 = vlaneseq
    %v249 = vshrl.u32 %v248, 7
    %v250 = vsub.s32 %v247, %v249
    %v251 = vrot.slane %v241, %v250
    %v253 = vunpack.c.l.s4 1966171168
    %v254 = vunpack.c.0.s8 %v253
    %v255 = vlaneseq
    %v256 = vshrl.u32 %v255, 7
    %v257 = vsub.s32 %v254, %v256
    %v258 = vrot.slane %v242, %v257
    %v260 = vunpack.c.l.s4 1966171168
    %v261 = vunpack.c.0.s8 %v260
    %v262 = vlaneseq
    %v263 = vshrl.u32 %v262, 7
    %v264 = vsub.s32 %v261, %v263
    %v265 = vrot.slane %v243, %v264
    %v267 = vunpack.c.l.s4 1966171168
    %v268 = vunpack.c.0.s8 %v267
    %v269 = vlaneseq
    %v270 = vshrl.u32 %v269, 7
    %v271 = vsub.s32 %v268, %v270
    %v272 = vrot.slane %v244, %v271
    %v273 = vcombine.low %v251, %v258
    %v274 = vcombine.low %v265, %v272
    %v276 = vunpack.c.l.s4 1966171168
    %v277 = vunpack.c.0.s8 %v276
    %v278 = vlaneseq
    %v279 = vshrl.u32 %v278, 7
    %v280 = vsub.s32 %v277, %v279
    %v281 = vrot.slane %v273, %v280
    %v283 = vunpack.c.l.s4 1966171168
    %v284 = vunpack.c.0.s8 %v283
    %v285 = vlaneseq
    %v286 = vshrl.u32 %v285, 7
    %v287 = vsub.s32 %v284, %v286
    %v288 = vrot.slane %v274, %v287
    %v289 = vcombine.low %v281, %v288
    %v290 = vcombine.low %v233, %v234
    %v291 = vcombine.low %v235, %v236
    %v292 = vcombine.low %v237, %v238
    %v293 = vcombine.low %v239, %v240
    %v295 = vunpack.c.l.s4 1966171168
    %v296 = vunpack.c.0.s8 %v295
    %v297 = vlaneseq
    %v298 = vshrl.u32 %v297, 7
    %v299 = vsub.s32 %v296, %v298
    %v300 = vrot.slane %v290, %v299
    %v302 = vunpack.c.l.s4 1966171168
    %v303 = vunpack.c.0.s8 %v302
    %v304 = vlaneseq
    %v305 = vshrl.u32 %v304, 7
    %v306 = vsub.s32 %v303, %v305
    %v307 = vrot.slane %v291, %v306
    %v309 = vunpack.c.l.s4 1966171168
    %v310 = vunpack.c.0.s8 %v309
    %v311 = vlaneseq
    %v312 = vshrl.u32 %v311, 7
    %v313 = vsub.s32 %v310, %v312
    %v314 = vrot.slane %v292, %v313
    %v316 = vunpack.c.l.s4 1966171168
    %v317 = vunpack.c.0.s8 %v316
    %v318 = vlaneseq
    %v319 = vshrl.u32 %v318, 7
    %v320 = vsub.s32 %v317, %v319
    %v321 = vrot.slane %v293, %v320
    %v322 = vcombine.low %v300, %v307
    %v323 = vcombine.low %v314, %v321
    %v325 = vunpack.c.l.s4 1966171168
    %v326 = vunpack.c.0.s8 %v325
    %v327 = vlaneseq
    %v328 = vshrl.u32 %v327, 7
    %v329 = vsub.s32 %v326, %v328
    %v330 = vrot.slane %v322, %v329
    %v332 = vunpack.c.l.s4 1966171168
    %v333 = vunpack.c.0.s8 %v332
    %v334 = vlaneseq
    %v335 = vshrl.u32 %v334, 7
    %v336 = vsub.s32 %v333, %v335
    %v337 = vrot.slane %v323, %v336
    %v338 = vcombine.low %v330, %v337
    %vm339 = vcmask 1040384
    %vm340 = vsmask.f32 0
    %vm341 = vmand %vm339, %vm340
    %vm342 = vcmask 1041409
    %vm343 = vsmask.f32 1024
    %vm344 = vmand %vm342, %vm343
    %vm345 = vmor %vm344, %vm341
    %vm346 = vcmask 1042434
    %vm347 = vsmask.f32 2048
    %vm348 = vmand %vm346, %vm347
    %vm349 = vmor %vm348, %vm345
    %vm350 = vcmask 1043459
    %vm351 = vsmask.f32 3072
    %vm352 = vmand %vm350, %vm351
    %vm353 = vmor %vm352, %vm349
    %vm354 = vcmask 1044484
    %vm355 = vsmask.f32 4096
    %vm356 = vmand %vm354, %vm355
    %vm357 = vmor %vm356, %vm353
    %vm358 = vcmask 1045509
    %vm359 = vsmask.f32 5120
    %vm360 = vmand %vm358, %vm359
    %vm361 = vmor %vm360, %vm357
    %vm362 = vcmask 1046534
    %vm363 = vsmask.f32 6144
    %vm364 = vmand %vm362, %vm363
    %vm365 = vmor %vm364, %vm361
    %vm366 = vcmask 1047559
    %vm367 = vsmask.f32 7168
    %vm368 = vmand %vm366, %vm367
    %vm369 = vmor %vm368, %vm365
    %v370 = vld [vmem:[#allocation5] sm:$0xff]
    %v371 = vsel %vm369, %v289, %v370
    %372 = vst [vmem:[#allocation5] sm:$0xff] %v371
    %v373 = vld [vmem:[#allocation5 + $0x8] sm:$0xff]
    %v374 = vsel %vm369, %v338, %v373
    %375 = vst [vmem:[#allocation5 + $0x8] sm:$0xff] %v374
    // Predicated region
    $region10: #{tpu_custom_call.1} parent=1 // pred_check
      _
    $region11: #{tpu_custom_call.1} parent=1 // pred_check_branch
      %377 = sbr.rel (0) target = $region13
    $region12: #{tpu_custom_call.1} parent=1 // pred_region
      %s379 = ssub.s32 256, 256
      %380 = vsyncadd [#allocation4], %s379
      %s382 = sshll.u32 [#allocation5], 4
      %s383 = int_to_ptr.vmem [resolvable:$true] %s382
      %385 = dma.vmem_to_hbm [thread:$0]  %s383, 256, %s1, [#allocation4]
    $region13: #{tpu_custom_call.1} parent=1 // pred_fallthru
      _
    // Predicated region
    $region14: #{tpu_custom_call.1} parent=1 // pred_check
      _
    $region15: #{tpu_custom_call.1} parent=1 // pred_check_branch
      %387 = sbr.rel (0) target = $region17
    $region16: #{tpu_custom_call.1} parent=1 // pred_region
      %388 = dma.done [#allocation4], 256
    $region17: #{tpu_custom_call.1} parent=1 // pred_fallthru
      _
    %389 = vsyncpa [#allocation3], 1
    %390 = vsyncpa [#allocation4], 1

</llo_original>
